<compile_context>
chip_gen: v6e
topology: v6e:2x2x1
jax: 0.10.0
libtpu: 0.0.40
codegen_flags: <defaults>
</compile_context>

<pallas_src>
import functools

import jax
import jax.numpy as jnp
from jax.experimental import pallas as pl
from jax.experimental.pallas import tpu as pltpu

LANES = 128
SUBLANES = 8
# Conservative double-buffered-input budget: safe on v5e (16 MiB scoped default),
# v6e (32 MiB) and v7x (32 MiB scoped / 64 MiB physical).
_VMEM_INPUT_BUDGET = 12 * 1024 * 1024


def _sublane_multiple(dtype) -> int:
    # 8 rows for 32-bit, 16 for bf16/fp16, 32 for int8/fp8 native-dtype tiles.
    return max(SUBLANES, 32 // jnp.dtype(dtype).itemsize)


def _rmsle_partial_kernel(p_ref, a_ref, o_ref, *,
                          n_rows, tile_rows, steps_per_chunk, any_partial):
    c = pl.program_id(0)   # parallel chunk axis (megacore on v7x)
    k = pl.program_id(1)   # arbitrary reduction axis within the chunk

    @pl.when(k == 0)
    def _init():
        o_ref[...] = jnp.zeros_like(o_ref)

    # Hot path: stream native dtype from HBM, upcast in VMEM, log1p diff,
    # square, then a VPU-only fold down to an (8, 128) partial-sum block.
    p = p_ref[...].astype(jnp.float32)
    a = a_ref[...].astype(jnp.float32)
    d = jnp.log1p(p) - jnp.log1p(a)
    sq = d * d

    def _fold(x):
        # (tile_rows, 128) -> (tile_rows/8, 8, 128), sum the vreg groups.
        return jnp.sum(x.reshape(tile_rows // SUBLANES, SUBLANES, LANES), axis=0)

    if any_partial:
        block_start = (c * steps_per_chunk + k) * tile_rows
        is_partial = block_start + tile_rows > n_rows

        @pl.when(jnp.logical_not(is_partial))
        def _acc_full():
            o_ref[...] += _fold(sq)

        @pl.when(is_partial)
        def _acc_masked():
            # Select (not multiply) so garbage/NaN in out-of-bounds rows of a
            # partial or fully-overrun block cannot leak into the sum.
            row = block_start + jax.lax.broadcasted_iota(
                jnp.int32, (tile_rows, LANES), 0)
            o_ref[...] += _fold(jnp.where(row < n_rows, sq, jnp.float32(0.0)))
    else:
        o_ref[...] += _fold(sq)


def rmsle_loss(pred, actual, *, tile_rows=4096):
    assert pred.shape == actual.shape, (pred.shape, actual.shape)
    n = pred.size
    if n == 0:
        return jnp.float32(jnp.nan)

    pred_flat = jnp.ravel(pred)
    actual_flat = jnp.ravel(actual)

    rows = n // LANES          # full 128-lane rows (the kernel's bulk)
    n_bulk = rows * LANES

    # Lane tail (< 128 elements): tiny, handled in plain JAX so the bulk never
    # needs a whole-array pad/copy.
    if n_bulk != n:
        pt = pred_flat[n_bulk:].astype(jnp.float32)
        at = actual_flat[n_bulk:].astype(jnp.float32)
        dt = jnp.log1p(pt) - jnp.log1p(at)
        tail_sum = jnp.sum(dt * dt)
    else:
        tail_sum = jnp.float32(0.0)

    if rows == 0:
        return jnp.sqrt(tail_sum / jnp.float32(n))

    if n_bulk != n:
        # TODO(synk): this prefix slice may still copy the bulk once in XLA; a
        # fully zero-copy misaligned path needs manual DMA on pl.ANY flat refs.
        p2 = pred_flat[:n_bulk].reshape(rows, LANES)
        a2 = actual_flat[:n_bulk].reshape(rows, LANES)
    else:
        p2 = pred_flat.reshape(rows, LANES)   # pure reshape, no copy
        a2 = actual_flat.reshape(rows, LANES)

    # Block height: multiple of the native-dtype sublane tile, clamped to the
    # problem size and to the double-buffered VMEM budget.
    sub = max(_sublane_multiple(p2.dtype), _sublane_multiple(a2.dtype))
    bytes_per_row = LANES * (p2.dtype.itemsize + a2.dtype.itemsize)
    max_rows_vmem = max(sub, (_VMEM_INPUT_BUDGET // (2 * bytes_per_row)) // sub * sub)
    tile_rows = max(sub, min(tile_rows, max_rows_vmem, pl.cdiv(rows, sub) * sub))
    tile_rows = pl.cdiv(tile_rows, sub) * sub

    total_blocks = pl.cdiv(rows, tile_rows)
    # Leading parallel chunk axis: 2 chunks -> both TensorCores on v7x.
    n_chunks = 2 if total_blocks >= 2 else 1
    steps_per_chunk = pl.cdiv(total_blocks, n_chunks)
    any_partial = (n_chunks * steps_per_chunk * tile_rows) != rows

    def in_map(c, k):
        # Clamp so overrun steps of the last chunk re-read a valid block
        # (their contribution is masked to zero in-kernel).
        return (jnp.minimum(c * steps_per_chunk + k, total_blocks - 1), 0)

    kernel = functools.partial(
        _rmsle_partial_kernel,
        n_rows=rows, tile_rows=tile_rows,
        steps_per_chunk=steps_per_chunk, any_partial=any_partial)

    bytes_in = p2.size * p2.dtype.itemsize + a2.size * a2.dtype.itemsize
    out_rows = n_chunks * SUBLANES

    partial = pl.pallas_call(
        kernel,
        out_shape=jax.ShapeDtypeStruct((out_rows, LANES), jnp.float32),
        grid_spec=pltpu.PrefetchScalarGridSpec(
            num_scalar_prefetch=0,
            grid=(n_chunks, steps_per_chunk),
            in_specs=[
                pl.BlockSpec((tile_rows, LANES), in_map),
                pl.BlockSpec((tile_rows, LANES), in_map),
            ],
            out_specs=pl.BlockSpec((SUBLANES, LANES), lambda c, k: (c, 0)),
        ),
        compiler_params=pltpu.CompilerParams(
            dimension_semantics=("parallel", "arbitrary"),
        ),
        cost_estimate=pl.CostEstimate(
            flops=3 * n, transcendentals=2 * n,
            bytes_accessed=bytes_in + out_rows * LANES * 4),
    )(p2, a2)

    total = jnp.sum(partial) + tail_sum
    return jnp.sqrt(total / jnp.float32(n))


if __name__ == "__main__":
    key = jax.random.PRNGKey(0)
    k1, k2, k3, k4 = jax.random.split(key, 4)

    # Main check: NCHW-shaped positive inputs (prediction / regression target).
    shape = (2, 4, 16, 16)
    pred = jnp.abs(jax.random.normal(k1, shape, dtype=jnp.float32)) + 0.1
    actual = jnp.abs(jax.random.normal(k2, shape, dtype=jnp.float32)) + 0.1

    loss = rmsle_loss(pred, actual)
    jax.block_until_ready(loss)

    ref = jnp.sqrt(jnp.mean((jnp.log1p(pred) - jnp.log1p(actual)) ** 2))
    assert jnp.allclose(loss, ref, rtol=1e-5, atol=1e-6), (loss, ref)

    # Extra check: lane-misaligned size + small tiles -> exercises the tail,
    # the masked accumulate and the 2-chunk parallel axis with a clamped map.
    shape2 = (5157,)   # 40 full rows of 128 + a 37-element lane tail
    pred2 = jnp.abs(jax.random.normal(k3, shape2, dtype=jnp.float32)) + 0.1
    actual2 = jnp.abs(jax.random.normal(k4, shape2, dtype=jnp.float32)) + 0.1
    loss2 = rmsle_loss(pred2, actual2, tile_rows=8)
    jax.block_until_ready(loss2)
    ref2 = jnp.sqrt(jnp.mean((jnp.log1p(pred2) - jnp.log1p(actual2)) ** 2))
    assert jnp.allclose(loss2, ref2, rtol=1e-5, atol=1e-6), (loss2, ref2)

    print("KERNEL_OK")
</pallas_src>

<mosaic_0001>
module attributes {stable_mosaic.version = 11 : i64} {
  func.func @_rmsle_partial_kernel(%arg0: i32, %arg1: i32, %arg2: memref<16x128xf32, #tpu.memory_space<vmem>>, %arg3: memref<16x128xf32, #tpu.memory_space<vmem>>, %arg4: memref<8x128xf32, #tpu.memory_space<vmem>>) attributes {dimension_semantics = [#tpu.dimension_semantics<parallel>, #tpu.dimension_semantics<arbitrary>], iteration_bounds = array<i64: 1, 1>, scalar_prefetch = 0 : i64, scratch_operands = 0 : i64, tpu.core_type = #tpu.core_type<tc>, window_params = [{transform_indices = @transform_0, window_bounds = array<i64: 16, 128>}, {transform_indices = @transform_1, window_bounds = array<i64: 16, 128>}, {transform_indices = @transform_2, window_bounds = array<i64: 8, 128>}]} {
    %c0_i32 = arith.constant 0 : i32
    %0 = arith.cmpi eq, %arg1, %c0_i32 : i32
    %1 = arith.extui %0 : i1 to i32
    %c0_i32_0 = arith.constant 0 : i32
    %2 = arith.cmpi ne, %1, %c0_i32_0 : i32
    scf.if %2 {
      %cst_8 = arith.constant 0.000000e+00 : f32
      %14 = vector.broadcast %cst_8 : f32 to vector<8x128xf32>
      %c0_9 = arith.constant 0 : index
      %c0_10 = arith.constant 0 : index
      %15 = vector.load %arg4[%c0_9, %c0_10] : memref<8x128xf32, #tpu.memory_space<vmem>>, vector<8x128xf32>
      tpu.vector_store %arg4[%c0_9, %c0_10], %14 {strides = array<i32>} : memref<8x128xf32, #tpu.memory_space<vmem>>, vector<8x128xf32>,
    } else {
    }
    %c0 = arith.constant 0 : index
    %c0_1 = arith.constant 0 : index
    %3 = vector.load %arg2[%c0, %c0_1] : memref<16x128xf32, #tpu.memory_space<vmem>>, vector<16x128xf32>
    %c0_2 = arith.constant 0 : index
    %c0_3 = arith.constant 0 : index
    %4 = vector.load %arg3[%c0_2, %c0_3] : memref<16x128xf32, #tpu.memory_space<vmem>>, vector<16x128xf32>
    %5 = math.log1p %3 : vector<16x128xf32>
    %6 = math.log1p %4 : vector<16x128xf32>
    %7 = arith.subf %5, %6 : vector<16x128xf32>
    %8 = arith.mulf %7, %7 : vector<16x128xf32>
    %c0_4 = arith.constant 0 : index
    %c0_5 = arith.constant 0 : index
    %9 = vector.load %arg4[%c0_4, %c0_5] : memref<8x128xf32, #tpu.memory_space<vmem>>, vector<8x128xf32>
    %10 = vector.shape_cast %8 : vector<16x128xf32> to vector<2x8x128xf32>
    %cst = arith.constant dense<0.000000e+00> : vector<8x128xf32>
    %11 = vector.multi_reduction <add>, %10, %cst [0] : vector<2x8x128xf32> to vector<8x128xf32>
    %12 = arith.addf %9, %11 : vector<8x128xf32>
    %c0_6 = arith.constant 0 : index
    %c0_7 = arith.constant 0 : index
    %13 = vector.load %arg4[%c0_6, %c0_7] : memref<8x128xf32, #tpu.memory_space<vmem>>, vector<8x128xf32>
    tpu.vector_store %arg4[%c0_6, %c0_7], %12 {strides = array<i32>} : memref<8x128xf32, #tpu.memory_space<vmem>>, vector<8x128xf32>,
    return
  }
  func.func @transform_0(%arg0: i32, %arg1: i32) -> (i32, i32) {
    %c1_i32 = arith.constant 1 : i32
    %0 = arith.muli %arg0, %c1_i32 : i32
    %1 = arith.addi %0, %arg1 : i32
    %c0_i32 = arith.constant 0 : i32
    %2 = arith.minsi %1, %c0_i32 : i32
    %c0_i32_0 = arith.constant 0 : i32
    %c0_i32_1 = arith.constant 0 : i32
    return %2, %c0_i32_0 : i32, i32
  }
  func.func @transform_1(%arg0: i32, %arg1: i32) -> (i32, i32) {
    %c1_i32 = arith.constant 1 : i32
    %0 = arith.muli %arg0, %c1_i32 : i32
    %1 = arith.addi %0, %arg1 : i32
    %c0_i32 = arith.constant 0 : i32
    %2 = arith.minsi %1, %c0_i32 : i32
    %c0_i32_0 = arith.constant 0 : i32
    %c0_i32_1 = arith.constant 0 : i32
    return %2, %c0_i32_0 : i32, i32
  }
  func.func @transform_2(%arg0: i32, %arg1: i32) -> (i32, i32) {
    %c0_i32 = arith.constant 0 : i32
    %c0_i32_0 = arith.constant 0 : i32
    return %arg0, %c0_i32 : i32, i32
  }
}

</mosaic_0001>

<llo_original>
// kernel: tpu_custom_call.1
$region0: #{tpu_custom_call.1}
  #allocation0 [shape = 'u32[]', space=smem, size = 0x4, offset = 0x4, fixed_abs, tag = 'smem constant byte address 0x4 - core index']
  #allocation1 [shape = 'u32[144,128]{1,0:T(1,128)}', space=vmem, size = 0x12000, scoped, tag = 'internal scratch']
  %s0 = inlined_call_operand.hbm [shape: f32[16,128], index: 0, kind: input, shape index: {}]
  %s1 = inlined_call_operand.hbm [shape: f32[16,128], index: 1, kind: input, shape index: {}]
  %s2 = inlined_call_operand.hbm [shape: f32[8,128], index: 2, kind: output, shape index: {}]
  %s3 = sld [smem:[#allocation0]]
  $region30: #{tpu_custom_call.1} parent=0
    _
  %s5 = ssub.s32 1, %s3
  %s6 = scalar_select 0, %s5, %s3
  $region1: #{tpu_custom_call.1} parent=0
    #allocation2 [shape = 'u8[8192]{0}', space=vmem, size = 0x2000, scoped, tag = 'input window, operand 0, single buffered']
    #allocation3 [shape = 's32[1]{0}', space=sflag, size = 0x4, scoped, tag = 'scoped memory for tpu_custom_call.1']
    #allocation4 [shape = 's32[1]{0}', space=sflag, size = 0x4, scoped, tag = 'scoped memory for tpu_custom_call.1']
    #allocation5 [shape = 'u8[8192]{0}', space=vmem, size = 0x2000, scoped, tag = 'input window, operand 1, single buffered']
    #allocation6 [shape = 's32[1]{0}', space=sflag, size = 0x4, scoped, tag = 'scoped memory for tpu_custom_call.1']
    #allocation7 [shape = 'u8[4096]{0}', space=vmem, size = 0x1000, scoped, tag = 'output window, operand 0, single buffered']
    %7 = vsyncpa [#allocation3], 0
    %8 = vsyncpa [#allocation6], 0
    %9 = vsyncpa [#allocation4], 0
    // Predicated region
    $region2: #{tpu_custom_call.1} parent=1 // pred_check
      _
    $region3: #{tpu_custom_call.1} parent=1 // pred_check_branch
      %11 = sbr.rel (0) target = $region5
    $region4: #{tpu_custom_call.1} parent=1 // pred_region
      %s12 = sadd.s32 0, 0
      %p13 = scmp.lt.s32.totalorder %s12, 0
      %s14 = scalar_select %p13, %s12, 0
      %s15 = smul.u32 2, %s14
      %s17 = ssub.s32 256, 256
      %18 = vsyncadd [#allocation3], %s17
      %s19 = smul.addr %s15, 128
      %s20 = scalar_lea.hbm %s0, %s19
      %s21 = sshll.u32 [#allocation2], 4
      %s22 = int_to_ptr.vmem [resolvable:$true] %s21
      %27 = dma.hbm_to_vmem [thread:$0]  %s20, 256, %s22, [#allocation3], 128, 128, 8
    $region5: #{tpu_custom_call.1} parent=1 // pred_fallthru
      _
    // Predicated region
    $region6: #{tpu_custom_call.1} parent=1 // pred_check
      _
    $region7: #{tpu_custom_call.1} parent=1 // pred_check_branch
      %29 = sbr.rel (0) target = $region9
    $region8: #{tpu_custom_call.1} parent=1 // pred_region
      %s30 = sadd.s32 0, 0
      %p31 = scmp.lt.s32.totalorder %s30, 0
      %s32 = scalar_select %p31, %s30, 0
      %s33 = smul.u32 2, %s32
      %s35 = ssub.s32 256, 256
      %36 = vsyncadd [#allocation6], %s35
      %s37 = smul.addr %s33, 128
      %s38 = scalar_lea.hbm %s1, %s37
      %s39 = sshll.u32 [#allocation5], 4
      %s40 = int_to_ptr.vmem [resolvable:$true] %s39
      %45 = dma.hbm_to_vmem [thread:$0]  %s38, 256, %s40, [#allocation6], 128, 128, 8
    $region9: #{tpu_custom_call.1} parent=1 // pred_fallthru
      _
    // Predicated region
    $region10: #{tpu_custom_call.1} parent=1 // pred_check
      _
    $region11: #{tpu_custom_call.1} parent=1 // pred_check_branch
      %47 = sbr.rel (0) target = $region13
    $region12: #{tpu_custom_call.1} parent=1 // pred_region
      %48 = dma.done [#allocation3], 256
    $region13: #{tpu_custom_call.1} parent=1 // pred_fallthru
      _
    // Predicated region
    $region14: #{tpu_custom_call.1} parent=1 // pred_check
      _
    $region15: #{tpu_custom_call.1} parent=1 // pred_check_branch
      %50 = sbr.rel (0) target = $region17
    $region16: #{tpu_custom_call.1} parent=1 // pred_region
      %51 = dma.done [#allocation6], 256
    $region17: #{tpu_custom_call.1} parent=1 // pred_fallthru
      _
    %s52 = sadd.s32 0, 0
    %p53 = scmp.lt.s32.totalorder %s52, 0
    %s54 = scalar_select %p53, %s52, 0
    %s55 = smul.u32 2, %s54
    %s56 = sadd.s32 0, 0
    %p57 = scmp.lt.s32.totalorder %s56, 0
    %s58 = scalar_select %p57, %s56, 0
    %s59 = smul.u32 2, %s58
    %p60 = scmp.eq.s32.totalorder 0, 0
    // Predicated region
    $region18: #{tpu_custom_call.1} parent=1 // pred_check
      %p61 = pneg %p60
    $region19: #{tpu_custom_call.1} parent=1 // pred_check_branch
      %63 = sbr.rel (%p61) target = $region21
    $region20: #{tpu_custom_call.1} parent=1 // pred_region
      %64 = vst [vmem:[#allocation7] sm:$0xff] 0.0
    $region21: #{tpu_custom_call.1} parent=1 // pred_fallthru
      _
    %v65 = vld [vmem:[#allocation2] sm:$0xff]
    %v66 = vld [vmem:[#allocation2 + $0x8] sm:$0xff]
    %v67 = vld [vmem:[#allocation5] sm:$0xff]
    %v68 = vld [vmem:[#allocation5 + $0x8] sm:$0xff]
    %v69 = vadd.f32 %v65, 1.0
    %v70 = vlog2.pop %v69
    %v71 = vmul.f32 %v70, 0.6931472
    %v72 = vmul.f32 -0.5, %v65
    %v73 = vadd.f32 %v72, 1.0
    %v74 = vmul.f32 %v73, %v65
    %v75 = vand.u32 2147483647, %v65
    %vm76 = vcmp.lt.f32.partialorder %v75, 0.0004427343
    %v77 = vsel %vm76, %v74, %v71
    %v78 = vadd.f32 %v66, 1.0
    %v79 = vlog2.pop %v78
    %v80 = vmul.f32 %v79, 0.6931472
    %v81 = vmul.f32 -0.5, %v66
    %v82 = vadd.f32 %v81, 1.0
    %v83 = vmul.f32 %v82, %v66
    %v84 = vand.u32 2147483647, %v66
    %vm85 = vcmp.lt.f32.partialorder %v84, 0.0004427343
    %v86 = vsel %vm85, %v83, %v80
    %v87 = vadd.f32 %v67, 1.0
    %v88 = vlog2.pop %v87
    %v89 = vmul.f32 %v88, 0.6931472
    %v90 = vmul.f32 -0.5, %v67
    %v91 = vadd.f32 %v90, 1.0
    %v92 = vmul.f32 %v91, %v67
    %v93 = vand.u32 2147483647, %v67
    %vm94 = vcmp.lt.f32.partialorder %v93, 0.0004427343
    %v95 = vsel %vm94, %v92, %v89
    %v96 = vadd.f32 %v68, 1.0
    %v97 = vlog2.pop %v96
    %v98 = vmul.f32 %v97, 0.6931472
    %v99 = vmul.f32 -0.5, %v68
    %v100 = vadd.f32 %v99, 1.0
    %v101 = vmul.f32 %v100, %v68
    %v102 = vand.u32 2147483647, %v68
    %vm103 = vcmp.lt.f32.partialorder %v102, 0.0004427343
    %v104 = vsel %vm103, %v101, %v98
    %v105 = vsub.f32 %v77, %v95
    %v106 = vsub.f32 %v86, %v104
    %v107 = vmul.f32 %v105, %v105
    %v108 = vmul.f32 %v106, %v106
    %v109 = vld [vmem:[#allocation7] sm:$0xff]
    %v110 = vadd.f32 %v107, %v108
    %v111 = vadd.f32 %v109, %v110
    %112 = vst [vmem:[#allocation7] sm:$0xff] %v111
    // Predicated region
    $region22: #{tpu_custom_call.1} parent=1 // pred_check
      _
    $region23: #{tpu_custom_call.1} parent=1 // pred_check_branch
      %114 = sbr.rel (0) target = $region25
    $region24: #{tpu_custom_call.1} parent=1 // pred_region
      %s116 = ssub.s32 128, 128
      %117 = vsyncadd [#allocation4], %s116
      %s119 = sshll.u32 [#allocation7], 4
      %s120 = int_to_ptr.vmem [resolvable:$true] %s119
      %122 = dma.vmem_to_hbm [thread:$0]  %s120, 128, %s2, [#allocation4]
    $region25: #{tpu_custom_call.1} parent=1 // pred_fallthru
      _
    // Predicated region
    $region26: #{tpu_custom_call.1} parent=1 // pred_check
      _
    $region27: #{tpu_custom_call.1} parent=1 // pred_check_branch
      %124 = sbr.rel (0) target = $region29
    $region28: #{tpu_custom_call.1} parent=1 // pred_region
      %125 = dma.done [#allocation4], 128
    $region29: #{tpu_custom_call.1} parent=1 // pred_fallthru
      _
    %126 = vsyncpa [#allocation3], 1
    %127 = vsyncpa [#allocation6], 1
    %128 = vsyncpa [#allocation4], 1

</llo_original>
